<compile_context>
chip_gen: v7x
topology: tpu7x:2x2x1
jax: 0.10.0
libtpu: 0.0.40
codegen_flags: <defaults>
</compile_context>

<pallas_src>
import functools

import jax
import jax.numpy as jnp
from jax.experimental import pallas as pl
from jax.experimental.pallas import tpu as pltpu

BN_EPS = 1e-5


# --------------------------------------------------------------------------- #
# Kernel (feature-major: batch on the lane axis)
# --------------------------------------------------------------------------- #
def _deepfm_kernel(h1_dim, embed_dim,
                   xt_ref, wbigT_ref, b1_ref, wlin_ref, srow_ref,
                   w2T_ref, b2_ref, wo_ref, bias_ref,
                   out_ref):
    xt = xt_ref[...]                                  # (D, TB), input dtype
    xf = xt.astype(jnp.float32)                       # elementwise math in f32

    # Single fused MXU push (M = h1+E, K = D, N = TB):
    #   rows [0:h1)      = BN-folded W1^T
    #   rows [h1:h1+E)   = v^T
    z = jnp.dot(wbigT_ref[...], xt, preferred_element_type=jnp.float32)  # (h1+E, TB)

    # Slices land on sublane-tile boundaries (h1 % 8 == 0): no lane relayouts.
    h = jnp.maximum(z[:h1_dim] + b1_ref[...], 0.0)                       # (h1, TB)
    xv = z[h1_dim:h1_dim + embed_dim]                                    # (E, TB)

    # FM first-order term: VPU square + sublane reduce.
    first = jnp.sum(xv * xv, axis=0, keepdims=True)                      # (1, TB)
    # FM (linear - second-order) fused into one VPU pass + sublane reduce:
    #   sum_d x_d * (w_d - x_d * s_d)   with s_d = sum_e v[d,e]^2
    lin_m_sec = jnp.sum(xf * (wlin_ref[...] - xf * srow_ref[...]),
                        axis=0, keepdims=True)                           # (1, TB)

    # Layer 2 (BN already folded): Linear -> ReLU.  MXU: M=h2, K=h1, N=TB.
    h = jnp.dot(w2T_ref[...], h, preferred_element_type=jnp.float32) + b2_ref[...]
    h = jnp.maximum(h, 0.0)                                              # (h2, TB)

    # Output head as VPU multiply + sublane reduce (no N=1 MXU push).
    deep = jnp.sum(h * wo_ref[...], axis=0, keepdims=True)               # (1, TB)

    out = jax.nn.sigmoid(deep + first + lin_m_sec + bias_ref[0])         # (1, TB)
    out_ref[...] = out.astype(out_ref.dtype)                             # dense store


# --------------------------------------------------------------------------- #
# Host-side parameter folding (BN fold + transposed weight fusion)
# --------------------------------------------------------------------------- #
def fold_params(p):
    """Fold eval-mode BatchNorm into the Linear layers and build the
    feature-major fused weight wbig^T = [W1_folded^T ; v^T]."""
    f32 = jnp.float32
    scale1 = p["g1"] * jax.lax.rsqrt(p["va1"].astype(f32) + BN_EPS)      # (1, h1)
    w1f = (p["w1"] * scale1).astype(f32)                                 # (D, h1)
    b1f = ((p["b1"] - p["m1"]) * scale1 + p["be1"]).astype(f32)          # (1, h1)
    scale2 = p["g2"] * jax.lax.rsqrt(p["va2"].astype(f32) + BN_EPS)      # (1, h2)
    w2f = (p["w2"] * scale2).astype(f32)                                 # (h1, h2)
    b2f = ((p["b2"] - p["m2"]) * scale2 + p["be2"]).astype(f32)          # (1, h2)

    d, e = p["v"].shape
    h1 = w1f.shape[1]
    h2 = w2f.shape[1]

    wbigT = jnp.concatenate([w1f.T, p["v"].T.astype(f32)], axis=0)       # (h1+E, D)
    pad = (-wbigT.shape[0]) % 8                       # keep sublane-tile aligned
    if pad:
        wbigT = jnp.concatenate([wbigT, jnp.zeros((pad, d), f32)], axis=0)

    return dict(
        wbigT=wbigT,                                                     # (h1+E(+pad), D)
        b1col=b1f.reshape(h1, 1),                                        # (h1, 1)
        wlincol=p["w_w"].reshape(d, 1).astype(f32),                      # (D, 1)
        srowcol=jnp.sum(p["v"].astype(f32) ** 2, axis=1).reshape(d, 1),  # (D, 1)
        w2T=w2f.T,                                                       # (h2, h1)
        b2col=b2f.reshape(h2, 1),                                        # (h2, 1)
        wocol=p["wo"].reshape(h2, 1).astype(f32),                        # (h2, 1)
        bias=(p["w_b"] + p["bo"]).reshape(1).astype(f32),                # (1,) SMEM
        h1=int(h1), e=int(e), h2=int(h2))


# --------------------------------------------------------------------------- #
# Wrapper
# --------------------------------------------------------------------------- #
def deepfm_forward(x, folded, *, block_batch=8192, vmem_limit_bytes=None):
    """x: (B, D). folded: output of fold_params. Returns (B, 1) f32."""
    B, D = x.shape
    h1, e, h2 = folded["h1"], folded["e"], folded["h2"]

    # Batch lives on the lane axis: tile in multiples of 128.  Keep >= 2 grid
    # steps when possible so both v7x TensorCores get work ("parallel" axis).
    tb = min(block_batch, B)
    if B >= 256 and tb > B // 2:
        tb = B // 2
    tb = max(128, (tb // 128) * 128)
    grid = (pl.cdiv(B, tb),)

    # Feature-major input (single XLA transpose; ideally delivered this way).
    xt = jnp.transpose(x)                                                # (D, B)

    if vmem_limit_bytes is None:
        itemsize = jnp.dtype(x.dtype).itemsize
        w_bytes = sum(int(folded[k].size) * 4 for k in
                      ("wbigT", "b1col", "wlincol", "srowcol",
                       "w2T", "b2col", "wocol", "bias"))
        rows = folded["wbigT"].shape[0]
        # 2x double-buffered x blocks + 2x out blocks + f32 intermediates.
        per_col = 2 * D * itemsize + 2 * 4 + 4 * (rows + h1 + h2 + 2 * D + 8)
        vmem_limit_bytes = int(min(per_col * tb + w_bytes + (4 << 20), 64 << 20))

    def const(shape):
        return pl.BlockSpec(shape, lambda i: (0,) * len(shape))

    out = pl.pallas_call(
        functools.partial(_deepfm_kernel, h1, e),
        out_shape=jax.ShapeDtypeStruct((1, B), jnp.float32),
        grid=grid,
        in_specs=[
            pl.BlockSpec((D, tb), lambda i: (0, i)),            # x^T: streamed / pipelined
            const(folded["wbigT"].shape),                       # fused W^T: resident
            const(folded["b1col"].shape),
            const(folded["wlincol"].shape),
            const(folded["srowcol"].shape),
            const(folded["w2T"].shape),
            const(folded["b2col"].shape),
            const(folded["wocol"].shape),
            pl.BlockSpec(memory_space=pltpu.MemorySpace.SMEM),  # scalar bias (w_b + b_o)
        ],
        out_specs=pl.BlockSpec((1, tb), lambda i: (0, i)),      # lane-dense output row
        compiler_params=pltpu.CompilerParams(
            dimension_semantics=("parallel",),
            vmem_limit_bytes=vmem_limit_bytes),
    )(xt, folded["wbigT"], folded["b1col"], folded["wlincol"],
      folded["srowcol"], folded["w2T"], folded["b2col"], folded["wocol"],
      folded["bias"])
    return out.reshape(B, 1)


# --------------------------------------------------------------------------- #
# Plain-JAX reference (uses the raw, unfolded parameters)
# --------------------------------------------------------------------------- #
def deepfm_reference(x, p):
    linear = x @ p["w_w"] + p["w_b"]
    first = jnp.sum((x @ p["v"]) ** 2, axis=1, keepdims=True)
    second = jnp.sum((x ** 2) @ (p["v"] ** 2), axis=1, keepdims=True)
    fm = linear + first - second
    h = x @ p["w1"] + p["b1"]
    h = p["g1"] * (h - p["m1"]) / jnp.sqrt(p["va1"] + BN_EPS) + p["be1"]
    h = jnp.maximum(h, 0.0)
    h = h @ p["w2"] + p["b2"]
    h = p["g2"] * (h - p["m2"]) / jnp.sqrt(p["va2"] + BN_EPS) + p["be2"]
    h = jnp.maximum(h, 0.0)
    deep = h @ p["wo"] + p["bo"]
    return jax.nn.sigmoid(deep + fm)


# --------------------------------------------------------------------------- #
# Deterministic synthetic parameters (shapes match the PyTorch module)
# --------------------------------------------------------------------------- #
def init_params(key, input_dim, embed_dim, layers_dim):
    assert len(layers_dim) == 2, "script hardcodes a 2-layer MLP"
    h1, h2 = layers_dim
    ks = jax.random.split(key, 12)
    f32 = jnp.float32

    def lin(kw, kb, fan_in, fan_out):
        bound = 1.0 / jnp.sqrt(fan_in)
        W = jax.random.uniform(kw, (fan_in, fan_out), f32, -bound, bound)
        b = jax.random.uniform(kb, (1, fan_out), f32, -bound, bound)
        return W, b

    w_w, w_b = lin(ks[0], ks[1], input_dim, 1)
    std_v = jnp.sqrt(2.0 / (input_dim + embed_dim))            # xavier_normal_
    v = std_v * jax.random.normal(ks[2], (input_dim, embed_dim), f32)
    w1, b1 = lin(ks[3], ks[4], input_dim, h1)
    w2, b2 = lin(ks[5], ks[6], h1, h2)
    wo, bo = lin(ks[7], ks[8], h2, 1)

    g1 = 1.0 + 0.1 * jax.random.normal(ks[9], (1, h1), f32)
    be1 = 0.05 * jax.random.normal(ks[10], (1, h1), f32)
    m1 = 0.1 * jax.random.normal(ks[11], (1, h1), f32)
    va1 = jnp.ones((1, h1), f32) * 0.9
    g2 = jnp.ones((1, h2), f32) * 1.1
    be2 = jnp.ones((1, h2), f32) * 0.02
    m2 = jnp.ones((1, h2), f32) * -0.05
    va2 = jnp.ones((1, h2), f32) * 1.2

    return dict(w_w=w_w, w_b=w_b, v=v,
                w1=w1, b1=b1, g1=g1, be1=be1, m1=m1, va1=va1,
                w2=w2, b2=b2, g2=g2, be2=be2, m2=m2, va2=va2,
                wo=wo, bo=bo)


if __name__ == "__main__":
    B, INPUT_DIM, EMBED_DIM = 512, 32, 16
    LAYERS_DIM = [64, 32]
    TB = 128                                  # 4 grid steps -> exercises pipelining / megacore

    key = jax.random.PRNGKey(0)
    kx, kp = jax.random.split(key)
    x = jax.random.normal(kx, (B, INPUT_DIM), jnp.float32)
    params = init_params(kp, INPUT_DIM, EMBED_DIM, LAYERS_DIM)
    folded = fold_params(params)

    out = jax.block_until_ready(deepfm_forward(x, folded, block_batch=TB))
    ref = jax.block_until_ready(deepfm_reference(x, params))

    assert out.shape == (B, 1), out.shape
    assert jnp.allclose(out, ref, atol=1e-4, rtol=1e-4), (
        float(jnp.max(jnp.abs(out - ref))))
    print("KERNEL_OK")
</pallas_src>

<mosaic_0001>
module attributes {stable_mosaic.version = 11 : i64} {
  func.func @_deepfm_kernel(%arg0: i32, %arg1: memref<32x128xf32, #tpu.memory_space<vmem>>, %arg2: memref<80x32xf32, #tpu.memory_space<vmem>>, %arg3: memref<64x1xf32, #tpu.memory_space<vmem>>, %arg4: memref<32x1xf32, #tpu.memory_space<vmem>>, %arg5: memref<32x1xf32, #tpu.memory_space<vmem>>, %arg6: memref<32x64xf32, #tpu.memory_space<vmem>>, %arg7: memref<32x1xf32, #tpu.memory_space<vmem>>, %arg8: memref<32x1xf32, #tpu.memory_space<vmem>>, %arg9: memref<1xf32, #tpu.memory_space<smem>>, %arg10: memref<1x128xf32, #tpu.memory_space<vmem>>) attributes {dimension_semantics = [#tpu.dimension_semantics<parallel>], iteration_bounds = array<i64: 4>, scalar_prefetch = 0 : i64, scratch_operands = 0 : i64, tpu.core_type = #tpu.core_type<tc>, window_params = [{transform_indices = @transform_0, window_bounds = array<i64: 32, 128>}, {pipeline_mode = #tpu.pipeline_mode<synchronous>, transform_indices = @transform_1, window_bounds = array<i64: 80, 32>}, {pipeline_mode = #tpu.pipeline_mode<synchronous>, transform_indices = @transform_2, window_bounds = array<i64: 64, 1>}, {pipeline_mode = #tpu.pipeline_mode<synchronous>, transform_indices = @transform_3, window_bounds = array<i64: 32, 1>}, {pipeline_mode = #tpu.pipeline_mode<synchronous>, transform_indices = @transform_4, window_bounds = array<i64: 32, 1>}, {pipeline_mode = #tpu.pipeline_mode<synchronous>, transform_indices = @transform_5, window_bounds = array<i64: 32, 64>}, {pipeline_mode = #tpu.pipeline_mode<synchronous>, transform_indices = @transform_6, window_bounds = array<i64: 32, 1>}, {pipeline_mode = #tpu.pipeline_mode<synchronous>, transform_indices = @transform_7, window_bounds = array<i64: 32, 1>}, {transform_indices = @transform_8, window_bounds = array<i64: 1>}, {transform_indices = @transform_9, window_bounds = array<i64: 1, 128>}]} {
    %c0 = arith.constant 0 : index
    %c0_0 = arith.constant 0 : index
    %0 = vector.load %arg1[%c0, %c0_0] : memref<32x128xf32, #tpu.memory_space<vmem>>, vector<32x128xf32>
    %c0_1 = arith.constant 0 : index
    %c0_2 = arith.constant 0 : index
    %1 = vector.load %arg2[%c0_1, %c0_2] : memref<80x32xf32, #tpu.memory_space<vmem>>, vector<80x32xf32>
    %cst = arith.constant dense<0.000000e+00> : vector<80x128xf32>
    %2 = tpu.matmul %1, %0, %cst {dimension_numbers = #tpu.dot_dimension_numbers<[1], [0], [0], [1], [0, 0, 1, 1], [], []>} : vector<80x32xf32>, vector<32x128xf32>, vector<80x128xf32> -> vector<80x128xf32>
    %3 = vector.extract_strided_slice %2 {offsets = [0, 0], sizes = [64, 128], strides = [1, 1]} : vector<80x128xf32> to vector<64x128xf32>
    %c0_3 = arith.constant 0 : index
    %c0_4 = arith.constant 0 : index
    %4 = vector.load %arg3[%c0_3, %c0_4] : memref<64x1xf32, #tpu.memory_space<vmem>>, vector<64x1xf32>
    %5 = vector.broadcast %4 : vector<64x1xf32> to vector<64x128xf32>
    %6 = arith.addf %3, %5 : vector<64x128xf32>
    %cst_5 = arith.constant 0.000000e+00 : f32
    %7 = vector.broadcast %cst_5 : f32 to vector<64x128xf32>
    %8 = arith.maximumf %6, %7 : vector<64x128xf32>
    %9 = vector.extract_strided_slice %2 {offsets = [64, 0], sizes = [16, 128], strides = [1, 1]} : vector<80x128xf32> to vector<16x128xf32>
    %10 = arith.mulf %9, %9 : vector<16x128xf32>
    %cst_6 = arith.constant dense<0.000000e+00> : vector<128xf32>
    %11 = vector.multi_reduction <add>, %10, %cst_6 [0] : vector<16x128xf32> to vector<128xf32>
    %12 = vector.shape_cast %11 : vector<128xf32> to vector<1x128xf32>
    %c0_7 = arith.constant 0 : index
    %c0_8 = arith.constant 0 : index
    %13 = vector.load %arg4[%c0_7, %c0_8] : memref<32x1xf32, #tpu.memory_space<vmem>>, vector<32x1xf32>
    %c0_9 = arith.constant 0 : index
    %c0_10 = arith.constant 0 : index
    %14 = vector.load %arg5[%c0_9, %c0_10] : memref<32x1xf32, #tpu.memory_space<vmem>>, vector<32x1xf32>
    %15 = vector.broadcast %14 : vector<32x1xf32> to vector<32x128xf32>
    %16 = arith.mulf %0, %15 : vector<32x128xf32>
    %17 = vector.broadcast %13 : vector<32x1xf32> to vector<32x128xf32>
    %18 = arith.subf %17, %16 : vector<32x128xf32>
    %19 = arith.mulf %0, %18 : vector<32x128xf32>
    %cst_11 = arith.constant dense<0.000000e+00> : vector<128xf32>
    %20 = vector.multi_reduction <add>, %19, %cst_11 [0] : vector<32x128xf32> to vector<128xf32>
    %21 = vector.shape_cast %20 : vector<128xf32> to vector<1x128xf32>
    %c0_12 = arith.constant 0 : index
    %c0_13 = arith.constant 0 : index
    %22 = vector.load %arg6[%c0_12, %c0_13] : memref<32x64xf32, #tpu.memory_space<vmem>>, vector<32x64xf32>
    %cst_14 = arith.constant dense<0.000000e+00> : vector<32x128xf32>
    %23 = tpu.matmul %22, %8, %cst_14 {dimension_numbers = #tpu.dot_dimension_numbers<[1], [0], [0], [1], [0, 0, 1, 1], [], []>} : vector<32x64xf32>, vector<64x128xf32>, vector<32x128xf32> -> vector<32x128xf32>
    %c0_15 = arith.constant 0 : index
    %c0_16 = arith.constant 0 : index
    %24 = vector.load %arg7[%c0_15, %c0_16] : memref<32x1xf32, #tpu.memory_space<vmem>>, vector<32x1xf32>
    %25 = vector.broadcast %24 : vector<32x1xf32> to vector<32x128xf32>
    %26 = arith.addf %23, %25 : vector<32x128xf32>
    %cst_17 = arith.constant 0.000000e+00 : f32
    %27 = vector.broadcast %cst_17 : f32 to vector<32x128xf32>
    %28 = arith.maximumf %26, %27 : vector<32x128xf32>
    %c0_18 = arith.constant 0 : index
    %c0_19 = arith.constant 0 : index
    %29 = vector.load %arg8[%c0_18, %c0_19] : memref<32x1xf32, #tpu.memory_space<vmem>>, vector<32x1xf32>
    %30 = vector.broadcast %29 : vector<32x1xf32> to vector<32x128xf32>
    %31 = arith.mulf %28, %30 : vector<32x128xf32>
    %cst_20 = arith.constant dense<0.000000e+00> : vector<128xf32>
    %32 = vector.multi_reduction <add>, %31, %cst_20 [0] : vector<32x128xf32> to vector<128xf32>
    %33 = vector.shape_cast %32 : vector<128xf32> to vector<1x128xf32>
    %34 = arith.addf %33, %12 : vector<1x128xf32>
    %35 = arith.addf %34, %21 : vector<1x128xf32>
    %c0_21 = arith.constant 0 : index
    %36 = memref.load %arg9[%c0_21] : memref<1xf32, #tpu.memory_space<smem>>
    %37 = vector.broadcast %36 : f32 to vector<1x128xf32>
    %38 = arith.addf %35, %37 : vector<1x128xf32>
    %39 = arith.negf %38 : vector<1x128xf32>
    %40 = math.exp %39 : vector<1x128xf32>
    %cst_22 = arith.constant 1.000000e+00 : f32
    %41 = vector.broadcast %cst_22 : f32 to vector<1x128xf32>
    %42 = arith.addf %41, %40 : vector<1x128xf32>
    %43 = arith.divf %41, %42 : vector<1x128xf32>
    %c0_23 = arith.constant 0 : index
    %c0_24 = arith.constant 0 : index
    %44 = vector.load %arg10[%c0_23, %c0_24] : memref<1x128xf32, #tpu.memory_space<vmem>>, vector<1x128xf32>
    tpu.vector_store %arg10[%c0_23, %c0_24], %43 {strides = array<i32>} : memref<1x128xf32, #tpu.memory_space<vmem>>, vector<1x128xf32>,
    return
  }
  func.func @transform_0(%arg0: i32) -> (i32, i32) {
    %c0_i32 = arith.constant 0 : i32
    %c0_i32_0 = arith.constant 0 : i32
    return %c0_i32, %arg0 : i32, i32
  }
  func.func @transform_1(%arg0: i32) -> (i32, i32) {
    %c0_i32 = arith.constant 0 : i32
    %c0_i32_0 = arith.constant 0 : i32
    %c0_i32_1 = arith.constant 0 : i32
    return %c0_i32, %c0_i32_0 : i32, i32
  }
  func.func @transform_2(%arg0: i32) -> (i32, i32) {
    %c0_i32 = arith.constant 0 : i32
    %c0_i32_0 = arith.constant 0 : i32
    %c0_i32_1 = arith.constant 0 : i32
    return %c0_i32, %c0_i32_0 : i32, i32
  }
  func.func @transform_3(%arg0: i32) -> (i32, i32) {
    %c0_i32 = arith.constant 0 : i32
    %c0_i32_0 = arith.constant 0 : i32
    %c0_i32_1 = arith.constant 0 : i32
    return %c0_i32, %c0_i32_0 : i32, i32
  }
  func.func @transform_4(%arg0: i32) -> (i32, i32) {
    %c0_i32 = arith.constant 0 : i32
    %c0_i32_0 = arith.constant 0 : i32
    %c0_i32_1 = arith.constant 0 : i32
    return %c0_i32, %c0_i32_0 : i32, i32
  }
  func.func @transform_5(%arg0: i32) -> (i32, i32) {
    %c0_i32 = arith.constant 0 : i32
    %c0_i32_0 = arith.constant 0 : i32
    %c0_i32_1 = arith.constant 0 : i32
    return %c0_i32, %c0_i32_0 : i32, i32
  }
  func.func @transform_6(%arg0: i32) -> (i32, i32) {
    %c0_i32 = arith.constant 0 : i32
    %c0_i32_0 = arith.constant 0 : i32
    %c0_i32_1 = arith.constant 0 : i32
    return %c0_i32, %c0_i32_0 : i32, i32
  }
  func.func @transform_7(%arg0: i32) -> (i32, i32) {
    %c0_i32 = arith.constant 0 : i32
    %c0_i32_0 = arith.constant 0 : i32
    %c0_i32_1 = arith.constant 0 : i32
    return %c0_i32, %c0_i32_0 : i32, i32
  }
  func.func @transform_8(%arg0: i32) -> i32 {
    %c0_i32 = arith.constant 0 : i32
    %c0_i32_0 = arith.constant 0 : i32
    return %c0_i32 : i32
  }
  func.func @transform_9(%arg0: i32) -> (i32, i32) {
    %c0_i32 = arith.constant 0 : i32
    %c0_i32_0 = arith.constant 0 : i32
    return %c0_i32, %arg0 : i32, i32
  }
}

</mosaic_0001>

<llo_original>
// kernel: tpu_custom_call.1
$region0: #{tpu_custom_call.1}
  #allocation0 [shape = 'u32[]', space=smem, size = 0x4, offset = 0x4, fixed_abs, tag = 'smem constant byte address 0x4 - core index']
  #allocation1 [shape = 'u32[144,128]{1,0:T(1,128)}', space=vmem, size = 0x12000, scoped, tag = 'internal scratch']
  #allocation2 [shape = 'f32[1]{0:T(128)S(6)}', space=smem, size = 0x200, scoped, tag = 'scoped memory for tpu_custom_call.1']
  %s0 = inlined_call_operand.vmem [shape: f32[32,512], index: 0, kind: input, shape index: {}]
  %s1 = inlined_call_operand.vmem [shape: f32[80,32], index: 1, kind: input, shape index: {}]
  %s2 = inlined_call_operand.vmem [shape: f32[64,1], index: 2, kind: input, shape index: {}]
  %s3 = inlined_call_operand.vmem [shape: f32[32,1], index: 3, kind: input, shape index: {}]
  %s4 = inlined_call_operand.vmem [shape: f32[32,1], index: 4, kind: input, shape index: {}]
  %s5 = inlined_call_operand.vmem [shape: f32[32,64], index: 5, kind: input, shape index: {}]
  %s6 = inlined_call_operand.vmem [shape: f32[32,1], index: 6, kind: input, shape index: {}]
  %s7 = inlined_call_operand.vmem [shape: f32[32,1], index: 7, kind: input, shape index: {}]
  %s8 = inlined_call_operand.<no memory space> [shape: f32[1], index: 8, kind: input, shape index: {}]
  %s9 = inlined_call_operand.hbm [shape: f32[1,512], index: 9, kind: output, shape index: {}]
  %s10 = sld [smem:[#allocation0]]
  $region107: #{tpu_custom_call.1} parent=0
    _
  %s12 = ssub.s32 1, %s10
  %s13 = scalar_select 0, %s12, %s10
  %14 = sst [smem:[#allocation2]] %s8
  $region1: #{tpu_custom_call.1} parent=0
    #allocation3 [shape = 'u8[32768]{0}', space=vmem, size = 0x8000, scoped, tag = 'input window, operand 0']
    #allocation4 [shape = 'u8[1024]{0}', space=vmem, size = 0x400, scoped, tag = 'output window, operand 0']
    #allocation5 [shape = 's32[2]{0}', space=sflag, size = 0x8, scoped, tag = 'scoped memory for tpu_custom_call.1']
    %15 = vsyncpa [#allocation5], 0
    %s16 = scalar_lea.sflag [#allocation5], 1
    %17 = vsyncpa %s16, 0
    loop: start=0, step=1, limit=6
    $region2: #{tpu_custom_call.1} parent=1 // loop_pre_header
      _
    $region3: #{tpu_custom_call.1} parent=1 // loop_header
      %s19 = sphi 0, %s23
      %p20 = scmp.ge.s32.totalorder %s19, 6
      %s29 = sphi 0, %s31
      %s32 = sphi 0, %s29
      %s33 = sphi 0, %s32
      %s49 = sphi 0, %s33
      %s53 = sphi 0, %s53
      %s55 = sphi 0, %s53
      %s56 = sphi 0, %s55
      %s70 = sphi 0, %s56
      %s74 = sphi 0, %s74
      %s76 = sphi 0, %s74
      %s77 = sphi 0, %s76
      %s91 = sphi 0, %s77
      %s95 = sphi 0, %s95
      %s97 = sphi 0, %s95
      %s98 = sphi 0, %s97
      %s112 = sphi 0, %s98
      %s116 = sphi 0, %s116
      %s118 = sphi 0, %s116
      %s119 = sphi 0, %s118
      %s133 = sphi 0, %s119
      %s137 = sphi 0, %s137
      %s139 = sphi 0, %s137
      %s140 = sphi 0, %s139
      %s154 = sphi 0, %s140
      %s158 = sphi 0, %s158
      %s160 = sphi 0, %s158
      %s161 = sphi 0, %s160
      %s175 = sphi 0, %s161
      %s179 = sphi 0, %s179
      %s181 = sphi 0, %s179
      %s182 = sphi 0, %s181
      %s196 = sphi 0, %s182
      %s200 = sphi 0, %s200
      %s202 = sphi 0, %s200
      %s203 = sphi 0, %s202
      %s217 = sphi 0, %s203
      %s223 = sphi 0, %s225
      %s226 = sphi 0, %s223
      %s227 = sphi 0, %s226
      %s243 = sphi 0, %s227
    $region4: #{tpu_custom_call.1} parent=1 // loop_header_branch
      %22 = sbr.rel (%p20) target = $region8
    $region5: #{tpu_custom_call.1} parent=1 // loop_body
      %s24 = ssub.s32 %s19, 1
      %s25 = ssub.s32 %s19, 2
      %s26 = sadd.s32 %s19, 1
      %s27 = ssub.s32 %s19, %s26
      %p28 = scmp.eq.s32.totalorder %s27, 0
      %s30 = sadd.s32 %s29, 1
      %s31 = scalar_select %p28, %s29, %s30
      %p34 = pneg %p28
      %p35 = scmp.eq.s32.totalorder %s19, 3
      %p36 = por %p34, %p35
      %p37 = scmp.ne.s32.totalorder %s29, %s32
      %p38 = scmp.eq.s32.totalorder %s19, 0
      %p39 = por %p37, %p38
      %p40 = scmp.ne.s32.totalorder %s29, %s32
      %p41 = scmp.eq.s32.totalorder %s24, 3
      %p42 = por %p40, %p41
      %p43 = scmp.ne.s32.totalorder %s32, %s33
      %p44 = scmp.eq.s32.totalorder %s24, 0
      %p45 = por %p43, %p44
      %p46 = scmp.ne.s32.totalorder %s32, %s33
      %p47 = scmp.eq.s32.totalorder %s25, 3
      %p48 = por %p46, %p47
      %p50 = scmp.ne.s32.totalorder %s33, %s49
      %p51 = scmp.eq.s32.totalorder %s25, 0
      %p52 = por %p50, %p51
      %s54 = sadd.s32 %s53, 1
      %p57 = scmp.eq.s32.totalorder %s19, 3
      %p58 = scmp.ne.s32.totalorder %s53, %s55
      %p59 = scmp.eq.s32.totalorder %s19, 0
      %p60 = por %p58, %p59
      %p61 = scmp.ne.s32.totalorder %s53, %s55
      %p62 = scmp.eq.s32.totalorder %s24, 3
      %p63 = por %p61, %p62
      %p64 = scmp.ne.s32.totalorder %s55, %s56
      %p65 = scmp.eq.s32.totalorder %s24, 0
      %p66 = por %p64, %p65
      %p67 = scmp.ne.s32.totalorder %s55, %s56
      %p68 = scmp.eq.s32.totalorder %s25, 3
      %p69 = por %p67, %p68
      %p71 = scmp.ne.s32.totalorder %s56, %s70
      %p72 = scmp.eq.s32.totalorder %s25, 0
      %p73 = por %p71, %p72
      %s75 = sadd.s32 %s74, 1
      %p78 = scmp.eq.s32.totalorder %s19, 3
      %p79 = scmp.ne.s32.totalorder %s74, %s76
      %p80 = scmp.eq.s32.totalorder %s19, 0
      %p81 = por %p79, %p80
      %p82 = scmp.ne.s32.totalorder %s74, %s76
      %p83 = scmp.eq.s32.totalorder %s24, 3
      %p84 = por %p82, %p83
      %p85 = scmp.ne.s32.totalorder %s76, %s77
      %p86 = scmp.eq.s32.totalorder %s24, 0
      %p87 = por %p85, %p86
      %p88 = scmp.ne.s32.totalorder %s76, %s77
      %p89 = scmp.eq.s32.totalorder %s25, 3
      %p90 = por %p88, %p89
      %p92 = scmp.ne.s32.totalorder %s77, %s91
      %p93 = scmp.eq.s32.totalorder %s25, 0
      %p94 = por %p92, %p93
      %s96 = sadd.s32 %s95, 1
      %p99 = scmp.eq.s32.totalorder %s19, 3
      %p100 = scmp.ne.s32.totalorder %s95, %s97
      %p101 = scmp.eq.s32.totalorder %s19, 0
      %p102 = por %p100, %p101
      %p103 = scmp.ne.s32.totalorder %s95, %s97
      %p104 = scmp.eq.s32.totalorder %s24, 3
      %p105 = por %p103, %p104
      %p106 = scmp.ne.s32.totalorder %s97, %s98
      %p107 = scmp.eq.s32.totalorder %s24, 0
      %p108 = por %p106, %p107
      %p109 = scmp.ne.s32.totalorder %s97, %s98
      %p110 = scmp.eq.s32.totalorder %s25, 3
      %p111 = por %p109, %p110
      %p113 = scmp.ne.s32.totalorder %s98, %s112
      %p114 = scmp.eq.s32.totalorder %s25, 0
      %p115 = por %p113, %p114
      %s117 = sadd.s32 %s116, 1
      %p120 = scmp.eq.s32.totalorder %s19, 3
      %p121 = scmp.ne.s32.totalorder %s116, %s118
      %p122 = scmp.eq.s32.totalorder %s19, 0
      %p123 = por %p121, %p122
      %p124 = scmp.ne.s32.totalorder %s116, %s118
      %p125 = scmp.eq.s32.totalorder %s24, 3
      %p126 = por %p124, %p125
      %p127 = scmp.ne.s32.totalorder %s118, %s119
      %p128 = scmp.eq.s32.totalorder %s24, 0
      %p129 = por %p127, %p128
      %p130 = scmp.ne.s32.totalorder %s118, %s119
      %p131 = scmp.eq.s32.totalorder %s25, 3
      %p132 = por %p130, %p131
      %p134 = scmp.ne.s32.totalorder %s119, %s133
      %p135 = scmp.eq.s32.totalorder %s25, 0
      %p136 = por %p134, %p135
      %s138 = sadd.s32 %s137, 1
      %p141 = scmp.eq.s32.totalorder %s19, 3
      %p142 = scmp.ne.s32.totalorder %s137, %s139
      %p143 = scmp.eq.s32.totalorder %s19, 0
      %p144 = por %p142, %p143
      %p145 = scmp.ne.s32.totalorder %s137, %s139
      %p146 = scmp.eq.s32.totalorder %s24, 3
      %p147 = por %p145, %p146
      %p148 = scmp.ne.s32.totalorder %s139, %s140
      %p149 = scmp.eq.s32.totalorder %s24, 0
      %p150 = por %p148, %p149
      %p151 = scmp.ne.s32.totalorder %s139, %s140
      %p152 = scmp.eq.s32.totalorder %s25, 3
      %p153 = por %p151, %p152
      %p155 = scmp.ne.s32.totalorder %s140, %s154
      %p156 = scmp.eq.s32.totalorder %s25, 0
      %p157 = por %p155, %p156
      %s159 = sadd.s32 %s158, 1
      %p162 = scmp.eq.s32.totalorder %s19, 3
      %p163 = scmp.ne.s32.totalorder %s158, %s160
      %p164 = scmp.eq.s32.totalorder %s19, 0
      %p165 = por %p163, %p164
      %p166 = scmp.ne.s32.totalorder %s158, %s160
      %p167 = scmp.eq.s32.totalorder %s24, 3
      %p168 = por %p166, %p167
      %p169 = scmp.ne.s32.totalorder %s160, %s161
      %p170 = scmp.eq.s32.totalorder %s24, 0
      %p171 = por %p169, %p170
      %p172 = scmp.ne.s32.totalorder %s160, %s161
      %p173 = scmp.eq.s32.totalorder %s25, 3
      %p174 = por %p172, %p173
      %p176 = scmp.ne.s32.totalorder %s161, %s175
      %p177 = scmp.eq.s32.totalorder %s25, 0
      %p178 = por %p176, %p177
      %s180 = sadd.s32 %s179, 1
      %p183 = scmp.eq.s32.totalorder %s19, 3
      %p184 = scmp.ne.s32.totalorder %s179, %s181
      %p185 = scmp.eq.s32.totalorder %s19, 0
      %p186 = por %p184, %p185
      %p187 = scmp.ne.s32.totalorder %s179, %s181
      %p188 = scmp.eq.s32.totalorder %s24, 3
      %p189 = por %p187, %p188
      %p190 = scmp.ne.s32.totalorder %s181, %s182
      %p191 = scmp.eq.s32.totalorder %s24, 0
      %p192 = por %p190, %p191
      %p193 = scmp.ne.s32.totalorder %s181, %s182
      %p194 = scmp.eq.s32.totalorder %s25, 3
      %p195 = por %p193, %p194
      %p197 = scmp.ne.s32.totalorder %s182, %s196
      %p198 = scmp.eq.s32.totalorder %s25, 0
      %p199 = por %p197, %p198
      %s201 = sadd.s32 %s200, 1
      %p204 = scmp.eq.s32.totalorder %s19, 3
      %p205 = scmp.ne.s32.totalorder %s200, %s202
      %p206 = scmp.eq.s32.totalorder %s19, 0
      %p207 = por %p205, %p206
      %p208 = scmp.ne.s32.totalorder %s200, %s202
      %p209 = scmp.eq.s32.totalorder %s24, 3
      %p210 = por %p208, %p209
      %p211 = scmp.ne.s32.totalorder %s202, %s203
      %p212 = scmp.eq.s32.totalorder %s24, 0
      %p213 = por %p211, %p212
      %p214 = scmp.ne.s32.totalorder %s202, %s203
      %p215 = scmp.eq.s32.totalorder %s25, 3
      %p216 = por %p214, %p215
      %p218 = scmp.ne.s32.totalorder %s203, %s217
      %p219 = scmp.eq.s32.totalorder %s25, 0
      %p220 = por %p218, %p219
      %s221 = ssub.s32 %s19, %s26
      %p222 = scmp.eq.s32.totalorder %s221, 0
      %s224 = sadd.s32 %s223, 1
      %s225 = scalar_select %p222, %s223, %s224
      %p228 = pneg %p222
      %p229 = scmp.eq.s32.totalorder %s19, 3
      %p230 = por %p228, %p229
      %p231 = scmp.ne.s32.totalorder %s223, %s226
      %p232 = scmp.eq.s32.totalorder %s19, 0
      %p233 = por %p231, %p232
      %p234 = scmp.ne.s32.totalorder %s223, %s226
      %p235 = scmp.eq.s32.totalorder %s24, 3
      %p236 = por %p234, %p235
      %p237 = scmp.ne.s32.totalorder %s226, %s227
      %p238 = scmp.eq.s32.totalorder %s24, 0
      %p239 = por %p237, %p238
      %p240 = scmp.ne.s32.totalorder %s226, %s227
      %p241 = scmp.eq.s32.totalorder %s25, 3
      %p242 = por %p240, %p241
      %p244 = scmp.ne.s32.totalorder %s227, %s243
      %p245 = scmp.eq.s32.totalorder %s25, 0
      %p246 = por %p244, %p245
      %p247 = scmp.le.s32.totalorder 1, %s19
      %p248 = scmp.lt.s32.totalorder %s19, 5
      %p249 = pnand %p247, %p248
      %p250 = pneg %p249
      // Predicated region
      $region9: #{tpu_custom_call.1} parent=5 // pred_check
        _
      $region10: #{tpu_custom_call.1} parent=5 // pred_check_branch
        %252 = sbr.rel (%p249) target = $region12
      $region11: #{tpu_custom_call.1} parent=5 // pred_region
        %s253 = ssub.s32 %s19, 1
        // Predicated region
        $region13: #{tpu_custom_call.1} parent=11 // pred_check
          %p254 = pneg %p66
        $region14: #{tpu_custom_call.1} parent=11 // pred_check_branch
          %256 = sbr.rel (%p254) target = $region16
        $region15: #{tpu_custom_call.1} parent=11 // pred_region
          _
        $region16: #{tpu_custom_call.1} parent=11 // pred_fallthru
          _
        // Predicated region
        $region17: #{tpu_custom_call.1} parent=11 // pred_check
          %p257 = pneg %p87
        $region18: #{tpu_custom_call.1} parent=11 // pred_check_branch
          %259 = sbr.rel (%p257) target = $region20
        $region19: #{tpu_custom_call.1} parent=11 // pred_region
          _
        $region20: #{tpu_custom_call.1} parent=11 // pred_fallthru
          _
        // Predicated region
        $region21: #{tpu_custom_call.1} parent=11 // pred_check
          %p260 = pneg %p108
        $region22: #{tpu_custom_call.1} parent=11 // pred_check_branch
          %262 = sbr.rel (%p260) target = $region24
        $region23: #{tpu_custom_call.1} parent=11 // pred_region
          _
        $region24: #{tpu_custom_call.1} parent=11 // pred_fallthru
          _
        // Predicated region
        $region25: #{tpu_custom_call.1} parent=11 // pred_check
          %p263 = pneg %p129
        $region26: #{tpu_custom_call.1} parent=11 // pred_check_branch
          %265 = sbr.rel (%p263) target = $region28
        $region27: #{tpu_custom_call.1} parent=11 // pred_region
          _
        $region28: #{tpu_custom_call.1} parent=11 // pred_fallthru
          _
        // Predicated region
        $region29: #{tpu_custom_call.1} parent=11 // pred_check
          %p266 = pneg %p150
        $region30: #{tpu_custom_call.1} parent=11 // pred_check_branch
          %268 = sbr.rel (%p266) target = $region32
        $region31: #{tpu_custom_call.1} parent=11 // pred_region
          _
        $region32: #{tpu_custom_call.1} parent=11 // pred_fallthru
          _
        // Predicated region
        $region33: #{tpu_custom_call.1} parent=11 // pred_check
          %p269 = pneg %p171
        $region34: #{tpu_custom_call.1} parent=11 // pred_check_branch
          %271 = sbr.rel (%p269) target = $region36
        $region35: #{tpu_custom_call.1} parent=11 // pred_region
          _
        $region36: #{tpu_custom_call.1} parent=11 // pred_fallthru
          _
        // Predicated region
        $region37: #{tpu_custom_call.1} parent=11 // pred_check
          %p272 = pneg %p192
        $region38: #{tpu_custom_call.1} parent=11 // pred_check_branch
          %274 = sbr.rel (%p272) target = $region40
        $region39: #{tpu_custom_call.1} parent=11 // pred_region
          _
        $region40: #{tpu_custom_call.1} parent=11 // pred_fallthru
          _
        // Predicated region
        $region41: #{tpu_custom_call.1} parent=11 // pred_check
          %p275 = pneg %p213
        $region42: #{tpu_custom_call.1} parent=11 // pred_check_branch
          %277 = sbr.rel (%p275) target = $region44
        $region43: #{tpu_custom_call.1} parent=11 // pred_region
          _
        $region44: #{tpu_custom_call.1} parent=11 // pred_fallthru
          _
      $region12: #{tpu_custom_call.1} parent=5 // pred_fallthru
        _
      %p278 = scmp.lt.s32.totalorder %s19, 4
      // Predicated region
      $region45: #{tpu_custom_call.1} parent=5 // pred_check
        %p279 = pneg %p278
      $region46: #{tpu_custom_call.1} parent=5 // pred_check_branch
        %281 = sbr.rel (%p279) target = $region48
      $region47: #{tpu_custom_call.1} parent=5 // pred_region
        // Predicated region
        $region49: #{tpu_custom_call.1} parent=47 // pred_check
          %p282 = pneg %p39
        $region50: #{tpu_custom_call.1} parent=47 // pred_check_branch
          %284 = sbr.rel (%p282) target = $region52
        $region51: #{tpu_custom_call.1} parent=47 // pred_region
          %s285 = sand.u32 %s29, 1
          %s286 = sand.u32 %s29, 1
          %s287 = smul.addr %s286, 32
          %s288 = scalar_lea.vmem [#allocation3], %s287
          %s289 = smul.addr %s19, 8
          %s290 = scalar_lea.vmem %s0, %s289
          // Predicated region
          $region53: #{tpu_custom_call.1} parent=51 // pred_check
            _
          $region54: #{tpu_custom_call.1} parent=51 // pred_check_branch
            %292 = sbr.rel (0) target = $region56
          $region55: #{tpu_custom_call.1} parent=51 // pred_region
            // Predicated region
            $region57: #{tpu_custom_call.1} parent=55 // pred_check
              _
            $region58: #{tpu_custom_call.1} parent=55 // pred_check_branch
              %294 = sbr.rel (0) target = $region60
            $region59: #{tpu_custom_call.1} parent=55 // pred_region
              // Predicated region
              $region72: #{tpu_custom_call.1} parent=59 // pred_check
                _
              $region73: #{tpu_custom_call.1} parent=59 // pred_check_branch
                %315 = sbr.rel (0) target = $region75
              $region74: #{tpu_custom_call.1} parent=59 // pred_region
                loop: start=0, step=1, limit=1
                $region76: #{tpu_custom_call.1} parent=74 // loop_pre_header
                  _
                $region77: #{tpu_custom_call.1} parent=74 // loop_header
                  %s317 = sphi 0, %s321
                  %p318 = scmp.ge.s32.totalorder %s317, 1
                  %s322 = sphi %s290, %s290
                  %s323 = sphi %s288, %s288
                $region78: #{tpu_custom_call.1} parent=74 // loop_header_branch
                  %320 = sbr.rel (%p318) target = $region82
                $region79: #{tpu_custom_call.1} parent=74 // loop_body
                  %v324 = vld [vmem:[%s322] sm:$0xff]
                  %325 = vst [vmem:[%s323] sm:$0xff] %v324
                  %v326 = vld [vmem:[%s322 + $0x20] sm:$0xff]
                  %327 = vst [vmem:[%s323 + $0x8] sm:$0xff] %v326
                  %v328 = vld [vmem:[%s322 + $0x40] sm:$0xff]
                  %329 = vst [vmem:[%s323 + $0x10] sm:$0xff] %v328
                  %v330 = vld [vmem:[%s322 + $0x60] sm:$0xff]
                  %331 = vst [vmem:[%s323 + $0x18] sm:$0xff] %v330
                $region80: #{tpu_custom_call.1} parent=74 // loop_footer
                  %s321 = sadd.s32 1, %s317
                $region81: #{tpu_custom_call.1} parent=74 // loop_footer_branch
                  %316 = sbr.rel target = $region77
                $region82: #{tpu_custom_call.1} parent=74 // loop_exit
                  _
              $region75: #{tpu_custom_call.1} parent=59 // pred_fallthru
                _
              // Predicated region
              $region83: #{tpu_custom_call.1} parent=59 // pred_check
                _
              $region84: #{tpu_custom_call.1} parent=59 // pred_check_branch
                %333 = sbr.rel target = $region86
              $region85: #{tpu_custom_call.1} parent=59 // pred_region
                _
              $region86: #{tpu_custom_call.1} parent=59 // pred_fallthru
                _
            $region60: #{tpu_custom_call.1} parent=55 // pred_fallthru
              _
            // Predicated region
            $region61: #{tpu_custom_call.1} parent=55 // pred_check
              _
            $region62: #{tpu_custom_call.1} parent=55 // pred_check_branch
              %296 = sbr.rel target = $region64
            $region63: #{tpu_custom_call.1} parent=55 // pred_region
              loop: start=0, step=1, limit=1
              $region65: #{tpu_custom_call.1} parent=63 // loop_pre_header
                _
              $region66: #{tpu_custom_call.1} parent=63 // loop_header
                %s299 = sphi 0, %s303
                %p300 = scmp.ge.s32.totalorder %s299, 1
                %s304 = sphi %s290, %s290
                %s305 = sphi %s288, %s288
              $region67: #{tpu_custom_call.1} parent=63 // loop_header_branch
                %302 = sbr.rel (%p300) target = $region71
              $region68: #{tpu_custom_call.1} parent=63 // loop_body
                %v306 = vld [vmem:[%s304] sm:$0xff]
                %307 = vst [vmem:[%s305] sm:$0xff] %v306
                %v308 = vld [vmem:[%s304 + $0x20] sm:$0xff]
                %309 = vst [vmem:[%s305 + $0x8] sm:$0xff] %v308
                %v310 = vld [vmem:[%s304 + $0x40] sm:$0xff]
                %311 = vst [vmem:[%s305 + $0x10] sm:$0xff] %v310
                %v312 = vld [vmem:[%s304 + $0x60] sm:$0xff]
                %313 = vst [vmem:[%s305 + $0x18] sm:$0xff] %v312
              $region69: #{tpu_custom_call.1} parent=63 // loop_footer
                %s303 = sadd.s32 1, %s299
              $region70: #{tpu_custom_call.1} parent=63 // loop_footer_branch
                %298 = sbr.rel target = $region66
              $region71: #{tpu_custom_call.1} parent=63 // loop_exit
                _
            $region64: #{tpu_custom_call.1} parent=55 // pred_fallthru
              _
          $region56: #{tpu_custom_call.1} parent=51 // pred_fallthru
            _
          %334 = vnop
        $region52: #{tpu_custom_call.1} parent=47 // pred_fallthru
          _
      $region48: #{tpu_custom_call.1} parent=5 // pred_fallthru
        _
      %p335 = scmp.le.s32.totalorder 1, %s19
      %p336 = scmp.lt.s32.totalorder %s19, 5
      %p337 = pnand %p335, %p336
      %p338 = pneg %p337
      // Predicated region
      $region87: #{tpu_custom_call.1} parent=5 // pred_check
        _
      $region88: #{tpu_custom_call.1} parent=5 // pred_check_branch
        %340 = sbr.rel (%p337) target = $region90
      $region89: #{tpu_custom_call.1} parent=5 // pred_region
        %s341 = ssub.s32 %s19, 1
        %s342 = sand.u32 %s32, 1
        %s343 = sand.u32 %s32, 1
        %s344 = smul.addr %s343, 32
        %s345 = scalar_lea.vmem [#allocation3], %s344
        // Predicated region
        $region91: #{tpu_custom_call.1} parent=89 // pred_check
          %p346 = pneg %p45
        $region92: #{tpu_custom_call.1} parent=89 // pred_check_branch
          %348 = sbr.rel (%p346) target = $region94
        $region93: #{tpu_custom_call.1} parent=89 // pred_region
          _
        $region94: #{tpu_custom_call.1} parent=89 // pred_fallthru
          _
        %s349 = sand.u32 %s32, 1
        %s350 = sand.u32 %s32, 1
        %s351 = smul.addr %s350, 32
        %s352 = scalar_lea.vmem [#allocation3], %s351
        %p353 = pneg %p45
        %p354 = pneg %p42
        %p355 = pneg %p66
        %p356 = pneg %p63
        %p357 = pneg %p87
        %p358 = pneg %p84
        %p359 = pneg %p108
        %p360 = pneg %p105
        %p361 = pneg %p129
        %p362 = pneg %p126
        %p363 = pneg %p150
        %p364 = pneg %p147
        %p365 = pneg %p171
        %p366 = pneg %p168
        %p367 = pneg %p192
        %p368 = pneg %p189
        %p369 = pneg %p213
        %p370 = pneg %p210
        %p371 = pneg %p239
        %p372 = pneg %p236
        %s373 = sand.u32 %s226, 1
        %s374 = scalar_lea.sflag [#allocation5], %s373
        %s375 = sand.u32 %s226, 1
        %s376 = scalar_lea.vmem [#allocation4], %s375
        %v377 = vld [vmem:[%s345] sm:$0xff]
        %v378 = vld [vmem:[%s345 + $0x8] sm:$0xff]
        %v379 = vld [vmem:[%s345 + $0x10] sm:$0xff]
        %v380 = vld [vmem:[%s345 + $0x18] sm:$0xff]
        %v381 = vld [vmem:[%s1] sm:$0xff]
        %v382 = vld [vmem:[%s1 + $0x8] sm:$0xff]
        %v383 = vld [vmem:[%s1 + $0x10] sm:$0xff]
        %v384 = vld [vmem:[%s1 + $0x18] sm:$0xff]
        %v385 = vld [vmem:[%s1 + $0x20] sm:$0xff]
        %v386 = vld [vmem:[%s1 + $0x28] sm:$0xff]
        %v387 = vld [vmem:[%s1 + $0x30] sm:$0xff]
        %v388 = vld [vmem:[%s1 + $0x38] sm:$0xff]
        %v389 = vld [vmem:[%s1 + $0x40] sm:$0xff]
        %v390 = vld [vmem:[%s1 + $0x48] sm:$0xff]
        %vm391 = vcmask 261120
        %v393 = vsel %vm391, %v381, 0
        %v396 = vsel %vm391, %v382, 0
        %v399 = vsel %vm391, %v383, 0
        %v402 = vsel %vm391, %v384, 0
        %v405 = vsel %vm391, %v385, 0
        %v408 = vsel %vm391, %v386, 0
        %v411 = vsel %vm391, %v387, 0
        %v414 = vsel %vm391, %v388, 0
        %v417 = vsel %vm391, %v389, 0
        %v420 = vsel %vm391, %v390, 0
        %422 = vmatprep.subr.mxu0 0.0
        %423 = vmatpush1.msra.mxu0 %v377
        %424 = vmatprep.subr.mxu0 0.0
        %425 = vmatpush1.msra.mxu0 %v378
        %426 = vmatprep.subr.mxu0 0.0
        %427 = vmatpush1.msra.mxu0 %v379
        %428 = vmatprep.subr.mxu0 0.0
        %429 = vmatpush1.msra.mxu0 %v380
        %430 = vmatprep.subr.mxu0 0.0
        %431 = vmatpush1.msra.mxu0 0.0
        %432 = vmatprep.subr.mxu0 0.0
        %433 = vmatpush1.msra.mxu0 0.0
        %434 = vmatprep.subr.mxu0 0.0
        %435 = vmatpush1.msra.mxu0 0.0
        %436 = vmatprep.subr.mxu0 0.0
        %437 = vmatpush1.msra.mxu0 0.0
        %438 = vmatprep.subr.mxu0 0.0
        %439 = vmatpush1.msra.mxu0 0.0
        %440 = vmatprep.subr.mxu0 0.0
        %441 = vmatpush1.msra.mxu0 0.0
        %442 = vmatprep.subr.mxu0 0.0
        %443 = vmatpush1.msra.mxu0 0.0
        %444 = vmatprep.subr.mxu0 0.0
        %445 = vmatpush1.msra.mxu0 0.0
        %446 = vmatprep.subr.mxu0 0.0
        %447 = vmatpush1.msra.mxu0 0.0
        %448 = vmatprep.subr.mxu0 0.0
        %449 = vmatpush1.msra.mxu0 0.0
        %450 = vmatprep.subr.mxu0 0.0
        %451 = vmatpush1.msra.mxu0 0.0
        %452 = vmatprep.subr.mxu0 0.0
        %453 = vmatpush1.msra.mxu0 0.0
        %454 = vmatprep.subr.mxu0 0.0
        %455 = vmatpush1.msra.mxu0 0.0
        %456 = vmatprep.subr.mxu0 0.0
        %457 = vmatpush1.msra.mxu0 0.0
        %458 = vmatprep.subr.mxu0 0.0
        %459 = vmatpush1.msra.mxu0 0.0
        %460 = vmatprep.subr.mxu0 0.0
        %461 = vmatpush1.msra.mxu0 0.0
        %462 = vmatprep.subr.mxu0 0.0
        %463 = vmatpush1.msra.mxu0 0.0
        %464 = vmatprep.subr.mxu0 0.0
        %465 = vmatpush1.msra.mxu0 0.0
        %466 = vmatprep.subr.mxu0 0.0
        %467 = vmatpush1.msra.mxu0 0.0
        %468 = vmatprep.subr.mxu0 0.0
        %469 = vmatpush1.msra.mxu0 0.0
        %470 = vmatprep.subr.mxu0 0.0
        %471 = vmatpush1.msra.mxu0 0.0
        %472 = vmatprep.subr.mxu0 0.0
        %473 = vmatpush1.msra.mxu0 0.0
        %474 = vmatprep.subr.mxu0 0.0
        %475 = vmatpush1.msra.mxu0 0.0
        %476 = vmatprep.subr.mxu0 0.0
        %477 = vmatpush1.msra.mxu0 0.0
        %478 = vmatprep.subr.mxu0 0.0
        %479 = vmatpush1.msra.mxu0 0.0
        %480 = vmatprep.subr.mxu0 0.0
        %481 = vmatpush1.msra.mxu0 0.0
        %482 = vmatprep.subr.mxu0 0.0
        %483 = vmatpush1.msra.mxu0 0.0
        %484 = vmatprep.subr.mxu0 0.0
        %485 = vmatpush1.msra.mxu0 0.0
        %486 = vmatprep.mubr.f32.mxu0 0.0
        %487 = vmatmul.mubr.f32.gmra.mrb[0].mxu0 %v393
        %v488 = vpop.f32.mrb[0].mxu0
        %v489 = vadd.f32 0.0, %v488
        %v490 = vpop.f32.mrb[0].mxu0
        %491 = vmatprep.mubr.f32.mxu0 0.0
        %492 = vmatmul.mubr.f32.gmra.mrb[0].mxu0 %v396
        %v493 = vpop.f32.mrb[0].mxu0
        %v494 = vadd.f32 0.0, %v493
        %v495 = vpop.f32.mrb[0].mxu0
        %496 = vmatprep.mubr.f32.mxu0 0.0
        %497 = vmatmul.mubr.f32.gmra.mrb[0].mxu0 %v399
        %v498 = vpop.f32.mrb[0].mxu0
        %v499 = vadd.f32 0.0, %v498
        %v500 = vpop.f32.mrb[0].mxu0
        %501 = vmatprep.mubr.f32.mxu0 0.0
        %502 = vmatmul.mubr.f32.gmra.mrb[0].mxu0 %v402
        %v503 = vpop.f32.mrb[0].mxu0
        %v504 = vadd.f32 0.0, %v503
        %v505 = vpop.f32.mrb[0].mxu0
        %506 = vmatprep.mubr.f32.mxu0 0.0
        %507 = vmatmul.mubr.f32.gmra.mrb[0].mxu0 %v405
        %v508 = vpop.f32.mrb[0].mxu0
        %v509 = vadd.f32 0.0, %v508
        %v510 = vpop.f32.mrb[0].mxu0
        %511 = vmatprep.mubr.f32.mxu0 0.0
        %512 = vmatmul.mubr.f32.gmra.mrb[0].mxu0 %v408
        %v513 = vpop.f32.mrb[0].mxu0
        %v514 = vadd.f32 0.0, %v513
        %v515 = vpop.f32.mrb[0].mxu0
        %516 = vmatprep.mubr.f32.mxu0 0.0
        %517 = vmatmul.mubr.f32.gmra.mrb[0].mxu0 %v411
        %v518 = vpop.f32.mrb[0].mxu0
        %v519 = vadd.f32 0.0, %v518
        %v520 = vpop.f32.mrb[0].mxu0
        %521 = vmatprep.mubr.f32.mxu0 0.0
        %522 = vmatmul.mubr.f32.gmra.mrb[0].mxu0 %v414
        %v523 = vpop.f32.mrb[0].mxu0
        %v524 = vadd.f32 0.0, %v523
        %v525 = vpop.f32.mrb[0].mxu0
        %526 = vmatprep.mubr.f32.mxu0 0.0
        %527 = vmatmul.mubr.f32.gmra.mrb[0].mxu0 %v417
        %v528 = vpop.f32.mrb[0].mxu0
        %v529 = vadd.f32 0.0, %v528
        %v530 = vpop.f32.mrb[0].mxu0
        %531 = vmatprep.mubr.f32.mxu0 0.0
        %532 = vmatmul.mubr.f32.gmra.mrb[0].mxu0 %v420
        %v533 = vpop.f32.mrb[0].mxu0
        %v534 = vadd.f32 0.0, %v533
        %v535 = vpop.f32.mrb[0].mxu0
        %536 = vdwg.mxu0
        %v537 = vld [vmem:[%s2] sm:$0xff]
        %v538 = vld [vmem:[%s2 + $0x8] sm:$0xff]
        %v539 = vld [vmem:[%s2 + $0x10] sm:$0xff]
        %v540 = vld [vmem:[%s2 + $0x18] sm:$0xff]
        %v541 = vld [vmem:[%s2 + $0x20] sm:$0xff]
        %v542 = vld [vmem:[%s2 + $0x28] sm:$0xff]
        %v543 = vld [vmem:[%s2 + $0x30] sm:$0xff]
        %v544 = vld [vmem:[%s2 + $0x38] sm:$0xff]
        %546 = vset.pattern.permute.xlu0 0
        %547 = vperm.xlu0 %546, %v537
        %v548 = vpop.permute.xlu0 %547
        %551 = vset.pattern.permute.xlu0 0
        %552 = vperm.xlu0 %551, %v538
        %v553 = vpop.permute.xlu0 %552
        %556 = vset.pattern.permute.xlu0 0
        %557 = vperm.xlu0 %556, %v539
        %v558 = vpop.permute.xlu0 %557
        %561 = vset.pattern.permute.xlu0 0
        %562 = vperm.xlu0 %561, %v540
        %v563 = vpop.permute.xlu0 %562
        %566 = vset.pattern.permute.xlu0 0
        %567 = vperm.xlu0 %566, %v541
        %v568 = vpop.permute.xlu0 %567
        %571 = vset.pattern.permute.xlu0 0
        %572 = vperm.xlu0 %571, %v542
        %v573 = vpop.permute.xlu0 %572
        %576 = vset.pattern.permute.xlu0 0
        %577 = vperm.xlu0 %576, %v543
        %v578 = vpop.permute.xlu0 %577
        %581 = vset.pattern.permute.xlu0 0
        %582 = vperm.xlu0 %581, %v544
        %v583 = vpop.permute.xlu0 %582
        %v585 = vadd.f32 %v489, %v548
        %v586 = vadd.f32 %v494, %v553
        %v587 = vadd.f32 %v499, %v558
        %v588 = vadd.f32 %v504, %v563
        %v589 = vadd.f32 %v509, %v568
        %v590 = vadd.f32 %v514, %v573
        %v591 = vadd.f32 %v519, %v578
        %v592 = vadd.f32 %v524, %v583
        %v593 = vmax.f32 %v585, 0.0
        %v594 = vmax.f32 %v586, 0.0
        %v595 = vmax.f32 %v587, 0.0
        %v596 = vmax.f32 %v588, 0.0
        %v597 = vmax.f32 %v589, 0.0
        %v598 = vmax.f32 %v590, 0.0
        %v599 = vmax.f32 %v591, 0.0
        %v600 = vmax.f32 %v592, 0.0
        %v601 = vmul.f32 %v529, %v529
        %v602 = vmul.f32 %v534, %v534
        %v603 = vadd.f32 %v601, %v602
        %v604 = vrot.slane %v603, 4
        %v605 = vadd.f32 %v603, %v604
        %v606 = vrot.slane %v605, 2
        %v607 = vadd.f32 %v605, %v606
        %v608 = vrot.slane %v607, 1
        %v609 = vadd.f32 %v607, %v608
        %v610 = vld [vmem:[%s3] sm:$0xff]
        %v611 = vld [vmem:[%s3 + $0x8] sm:$0xff]
        %v612 = vld [vmem:[%s3 + $0x10] sm:$0xff]
        %v613 = vld [vmem:[%s3 + $0x18] sm:$0xff]
        %v614 = vld [vmem:[%s4] sm:$0xff]
        %v615 = vld [vmem:[%s4 + $0x8] sm:$0xff]
        %v616 = vld [vmem:[%s4 + $0x10] sm:$0xff]
        %v617 = vld [vmem:[%s4 + $0x18] sm:$0xff]
        %619 = vset.pattern.permute.xlu0 0
        %620 = vperm.xlu0 %619, %v614
        %v621 = vpop.permute.xlu0 %620
        %624 = vset.pattern.permute.xlu0 0
        %625 = vperm.xlu0 %624, %v615
        %v626 = vpop.permute.xlu0 %625
        %629 = vset.pattern.permute.xlu0 0
        %630 = vperm.xlu0 %629, %v616
        %v631 = vpop.permute.xlu0 %630
        %634 = vset.pattern.permute.xlu0 0
        %635 = vperm.xlu0 %634, %v617
        %v636 = vpop.permute.xlu0 %635
        %v638 = vmul.f32 %v377, %v621
        %v639 = vmul.f32 %v378, %v626
        %v640 = vmul.f32 %v379, %v631
        %v641 = vmul.f32 %v380, %v636
        %643 = vset.pattern.permute.xlu0 0
        %644 = vperm.xlu0 %643, %v610
        %v645 = vpop.permute.xlu0 %644
        %648 = vset.pattern.permute.xlu0 0
        %649 = vperm.xlu0 %648, %v611
        %v650 = vpop.permute.xlu0 %649
        %653 = vset.pattern.permute.xlu0 0
        %654 = vperm.xlu0 %653, %v612
        %v655 = vpop.permute.xlu0 %654
        %658 = vset.pattern.permute.xlu0 0
        %659 = vperm.xlu0 %658, %v613
        %v660 = vpop.permute.xlu0 %659
        %v662 = vsub.f32 %v645, %v638
        %v663 = vsub.f32 %v650, %v639
        %v664 = vsub.f32 %v655, %v640
        %v665 = vsub.f32 %v660, %v641
        %v666 = vmul.f32 %v377, %v662
        %v667 = vmul.f32 %v378, %v663
        %v668 = vmul.f32 %v379, %v664
        %v669 = vmul.f32 %v380, %v665
        %v670 = vadd.f32 %v666, %v667
        %v671 = vadd.f32 %v670, %v668
        %v672 = vadd.f32 %v671, %v669
        %v673 = vrot.slane %v672, 4
        %v674 = vadd.f32 %v672, %v673
        %v675 = vrot.slane %v674, 2
        %v676 = vadd.f32 %v674, %v675
        %v677 = vrot.slane %v676, 1
        %v678 = vadd.f32 %v676, %v677
        %v679 = vld [vmem:[%s5] sm:$0xff]
        %v680 = vld [vmem:[%s5 + $0x8] sm:$0xff]
        %v681 = vld [vmem:[%s5 + $0x10] sm:$0xff]
        %v682 = vld [vmem:[%s5 + $0x18] sm:$0xff]
        %v683 = vld [vmem:[%s6] sm:$0xff]
        %v684 = vld [vmem:[%s6 + $0x8] sm:$0xff]
        %v685 = vld [vmem:[%s6 + $0x10] sm:$0xff]
        %v686 = vld [vmem:[%s6 + $0x18] sm:$0xff]
        %688 = vset.pattern.permute.xlu0 0
        %689 = vperm.xlu0 %688, %v683
        %v690 = vpop.permute.xlu0 %689
        %693 = vset.pattern.permute.xlu0 0
        %694 = vperm.xlu0 %693, %v684
        %v695 = vpop.permute.xlu0 %694
        %698 = vset.pattern.permute.xlu0 0
        %699 = vperm.xlu0 %698, %v685
        %v700 = vpop.permute.xlu0 %699
        %703 = vset.pattern.permute.xlu0 0
        %704 = vperm.xlu0 %703, %v686
        %v705 = vpop.permute.xlu0 %704
        %vm707 = vcmask 523264
        %v709 = vsel %vm707, %v679, 0
        %v712 = vsel %vm707, %v680, 0
        %v715 = vsel %vm707, %v681, 0
        %v718 = vsel %vm707, %v682, 0
        %720 = vmatprep.subr.mxu0 0.0
        %721 = vmatpush1.msra.mxu0 %v593
        %722 = vmatprep.subr.mxu0 0.0
        %723 = vmatpush1.msra.mxu0 %v594
        %724 = vmatprep.subr.mxu0 0.0
        %725 = vmatpush1.msra.mxu0 %v595
        %726 = vmatprep.subr.mxu0 0.0
        %727 = vmatpush1.msra.mxu0 %v596
        %728 = vmatprep.subr.mxu0 0.0
        %729 = vmatpush1.msra.mxu0 %v597
        %730 = vmatprep.subr.mxu0 0.0
        %731 = vmatpush1.msra.mxu0 %v598
        %732 = vmatprep.subr.mxu0 0.0
        %733 = vmatpush1.msra.mxu0 %v599
        %734 = vmatprep.subr.mxu0 0.0
        %735 = vmatpush1.msra.mxu0 %v600
        %736 = vmatprep.subr.mxu0 0.0
        %737 = vmatpush1.msra.mxu0 0.0
        %738 = vmatprep.subr.mxu0 0.0
        %739 = vmatpush1.msra.mxu0 0.0
        %740 = vmatprep.subr.mxu0 0.0
        %741 = vmatpush1.msra.mxu0 0.0
        %742 = vmatprep.subr.mxu0 0.0
        %743 = vmatpush1.msra.mxu0 0.0
        %744 = vmatprep.subr.mxu0 0.0
        %745 = vmatpush1.msra.mxu0 0.0
        %746 = vmatprep.subr.mxu0 0.0
        %747 = vmatpush1.msra.mxu0 0.0
        %748 = vmatprep.subr.mxu0 0.0
        %749 = vmatpush1.msra.mxu0 0.0
        %750 = vmatprep.subr.mxu0 0.0
        %751 = vmatpush1.msra.mxu0 0.0
        %752 = vmatprep.subr.mxu0 0.0
        %753 = vmatpush1.msra.mxu0 0.0
        %754 = vmatprep.subr.mxu0 0.0
        %755 = vmatpush1.msra.mxu0 0.0
        %756 = vmatprep.subr.mxu0 0.0
        %757 = vmatpush1.msra.mxu0 0.0
        %758 = vmatprep.subr.mxu0 0.0
        %759 = vmatpush1.msra.mxu0 0.0
        %760 = vmatprep.subr.mxu0 0.0
        %761 = vmatpush1.msra.mxu0 0.0
        %762 = vmatprep.subr.mxu0 0.0
        %763 = vmatpush1.msra.mxu0 0.0
        %764 = vmatprep.subr.mxu0 0.0
        %765 = vmatpush1.msra.mxu0 0.0
        %766 = vmatprep.subr.mxu0 0.0
        %767 = vmatpush1.msra.mxu0 0.0
        %768 = vmatprep.subr.mxu0 0.0
        %769 = vmatpush1.msra.mxu0 0.0
        %770 = vmatprep.subr.mxu0 0.0
        %771 = vmatpush1.msra.mxu0 0.0
        %772 = vmatprep.subr.mxu0 0.0
        %773 = vmatpush1.msra.mxu0 0.0
        %774 = vmatprep.subr.mxu0 0.0
        %775 = vmatpush1.msra.mxu0 0.0
        %776 = vmatprep.subr.mxu0 0.0
        %777 = vmatpush1.msra.mxu0 0.0
        %778 = vmatprep.subr.mxu0 0.0
        %779 = vmatpush1.msra.mxu0 0.0
        %780 = vmatprep.subr.mxu0 0.0
        %781 = vmatpush1.msra.mxu0 0.0
        %782 = vmatprep.subr.mxu0 0.0
        %783 = vmatpush1.msra.mxu0 0.0
        %784 = vmatprep.mubr.f32.mxu0 0.0
        %785 = vmatmul.mubr.f32.gmra.mrb[0].mxu0 %v709
        %v786 = vpop.f32.mrb[0].mxu0
        %v787 = vadd.f32 %v690, %v786
        %v788 = vpop.f32.mrb[0].mxu0
        %789 = vmatprep.mubr.f32.mxu0 0.0
        %790 = vmatmul.mubr.f32.gmra.mrb[0].mxu0 %v712
        %v791 = vpop.f32.mrb[0].mxu0
        %v792 = vadd.f32 %v695, %v791
        %v793 = vpop.f32.mrb[0].mxu0
        %794 = vmatprep.mubr.f32.mxu0 0.0
        %795 = vmatmul.mubr.f32.gmra.mrb[0].mxu0 %v715
        %v796 = vpop.f32.mrb[0].mxu0
        %v797 = vadd.f32 %v700, %v796
        %v798 = vpop.f32.mrb[0].mxu0
        %799 = vmatprep.mubr.f32.mxu0 0.0
        %800 = vmatmul.mubr.f32.gmra.mrb[0].mxu0 %v718
        %v801 = vpop.f32.mrb[0].mxu0
        %v802 = vadd.f32 %v705, %v801
        %v803 = vpop.f32.mrb[0].mxu0
        %804 = vdwg.mxu0
        %v805 = vmax.f32 %v787, 0.0
        %v806 = vmax.f32 %v792, 0.0
        %v807 = vmax.f32 %v797, 0.0
        %v808 = vmax.f32 %v802, 0.0
        %v809 = vld [vmem:[%s7] sm:$0xff]
        %v810 = vld [vmem:[%s7 + $0x8] sm:$0xff]
        %v811 = vld [vmem:[%s7 + $0x10] sm:$0xff]
        %v812 = vld [vmem:[%s7 + $0x18] sm:$0xff]
        %814 = vset.pattern.permute.xlu0 0
        %815 = vperm.xlu0 %814, %v809
        %v816 = vpop.permute.xlu0 %815
        %819 = vset.pattern.permute.xlu0 0
        %820 = vperm.xlu0 %819, %v810
        %v821 = vpop.permute.xlu0 %820
        %824 = vset.pattern.permute.xlu0 0
        %825 = vperm.xlu0 %824, %v811
        %v826 = vpop.permute.xlu0 %825
        %829 = vset.pattern.permute.xlu0 0
        %830 = vperm.xlu0 %829, %v812
        %v831 = vpop.permute.xlu0 %830
        %v833 = vmul.f32 %v805, %v816
        %v834 = vmul.f32 %v806, %v821
        %v835 = vmul.f32 %v807, %v826
        %v836 = vmul.f32 %v808, %v831
        %v837 = vadd.f32 %v833, %v834
        %v838 = vadd.f32 %v837, %v835
        %v839 = vadd.f32 %v838, %v836
        %v840 = vrot.slane %v839, 4
        %v841 = vadd.f32 %v839, %v840
        %v842 = vrot.slane %v841, 2
        %v843 = vadd.f32 %v841, %v842
        %v844 = vrot.slane %v843, 1
        %v845 = vadd.f32 %v843, %v844
        %v846 = vadd.f32 %v845, %v609
        %v847 = vadd.f32 %v846, %v678
        %s848 = sld [smem:[#allocation2]]
        %v849 = vstv %s848
        %v850 = vadd.f32 %v847, %v849
        %v851 = vxor.u32 %v850, 2147483648
        %v852 = vmul.f32 %v851, 1.442695
        %v853 = vpow.pop %v852
        %v854 = vadd.f32 %v853, 1.0
        %v855 = vrcp.pop %v854
        %v856 = vmul.f32 1.0, %v855
        %857 = vst [vmem:[%s376] sm:$0x1] %v856
        %s858 = sand.u32 %s226, 1
        %s859 = scalar_lea.sflag [#allocation5], %s858
        %s860 = sand.u32 %s226, 1
        %s861 = scalar_lea.vmem [#allocation4], %s860
        // Predicated region
        $region95: #{tpu_custom_call.1} parent=89 // pred_check
          %p862 = pneg %p236
        $region96: #{tpu_custom_call.1} parent=89 // pred_check_branch
          %864 = sbr.rel (%p862) target = $region98
        $region97: #{tpu_custom_call.1} parent=89 // pred_region
          %s866 = ssub.s32 16, 16
          %867 = vsyncadd %s859, %s866
          %s868 = smul.addr %s24, 16
          %s869 = scalar_lea.hbm %s9, %s868
          %s871 = sshll.u32 %s861, 4
          %s872 = int_to_ptr.vmem [resolvable:$true] %s871
          %874 = dma.vmem_to_hbm [thread:$0]  %s872, 16, %s869, %s859
        $region98: #{tpu_custom_call.1} parent=89 // pred_fallthru
          _
      $region90: #{tpu_custom_call.1} parent=5 // pred_fallthru
        _
      %p875 = scmp.le.s32.totalorder 2, %s19
      // Predicated region
      $region99: #{tpu_custom_call.1} parent=5 // pred_check
        %p876 = pneg %p875
      $region100: #{tpu_custom_call.1} parent=5 // pred_check_branch
        %878 = sbr.rel (%p876) target = $region102
      $region101: #{tpu_custom_call.1} parent=5 // pred_region
        %s879 = ssub.s32 %s19, 2
        // Predicated region
        $region103: #{tpu_custom_call.1} parent=101 // pred_check
          %p880 = pneg %p242
        $region104: #{tpu_custom_call.1} parent=101 // pred_check_branch
          %882 = sbr.rel (%p880) target = $region106
        $region105: #{tpu_custom_call.1} parent=101 // pred_region
          %s883 = sand.u32 %s227, 1
          %s884 = scalar_lea.sflag [#allocation5], %s883
          %s885 = sand.u32 %s227, 1
          %s886 = scalar_lea.vmem [#allocation4], %s885
          %887 = dma.done %s884, 16
        $region106: #{tpu_custom_call.1} parent=101 // pred_fallthru
          _
      $region102: #{tpu_custom_call.1} parent=5 // pred_fallthru
        _
    $region6: #{tpu_custom_call.1} parent=1 // loop_footer
      %s23 = sadd.s32 1, %s19
    $region7: #{tpu_custom_call.1} parent=1 // loop_footer_branch
      %18 = sbr.rel target = $region3
    $region8: #{tpu_custom_call.1} parent=1 // loop_exit
      _
    %888 = vsyncpa [#allocation5], 1
    %s889 = scalar_lea.sflag [#allocation5], 1
    %890 = vsyncpa %s889, 1

</llo_original>
